<compile_context>
chip_gen: v7x
topology: tpu7x:2x2x1
jax: 0.10.0
libtpu: 0.0.40
codegen_flags: <defaults>
</compile_context>

<pallas_src>
import jax
import jax.numpy as jnp
from jax.experimental import pallas as pl
from jax.experimental.pallas import tpu as pltpu


def _smffn_kernel(x_ref, w_ref, o_ref):
    # x_ref: (tm, d_model)      token tile
    # w_ref: (d_model, d_ff)    pre-transposed full projection weight (resident)
    # o_ref: (tm, d_ff // 2)
    d_half = o_ref.shape[-1]
    y = jnp.dot(x_ref[...], w_ref[...], preferred_element_type=jnp.float32)
    a = y[:, :d_half]                       # 128-lane-aligned static slices
    g = y[:, d_half:]
    sig = 0.5 * (jnp.tanh(0.5 * g) + 1.0)   # exact sigmoid, one EUP push/elem
    o_ref[...] = (a * sig).astype(o_ref.dtype)


def prepare_weight(w3):
    """w3 = nn.Linear(d_model, d_ff).weight, shape (d_ff, d_model).
    Returns the kernel-ready weight (d_model, d_ff). Call once per weight."""
    return jnp.transpose(w3)


def _pick_tm(M):
    # Biggest tile in the ladder that still leaves >= 2 grid steps, so both
    # v7x TensorCores get work and input/output pipelining stays active.
    for cand in (2048, 1024, 512, 256, 128, 64, 32, 16, 8):
        if 2 * cand <= M:
            return cand
    return M  # tiny M: single block


def smffn_branch(x, w_cat, *, compute_dtype=None):
    """x: (..., d_model); w_cat: (d_model, d_ff) from prepare_weight(w3).

    Returns (..., d_ff // 2), matching SMFFNBranch.forward (bias=False).
    compute_dtype=jnp.bfloat16 halves the HBM read of x (accumulate stays f32).
    """
    d_model, d_ff = w_cat.shape
    d_half = d_ff // 2
    out_dtype = x.dtype

    lead = x.shape[:-1]
    M = 1
    for s in lead:
        M *= s
    x2 = x.reshape(M, d_model)

    if compute_dtype is not None:
        x2 = x2.astype(compute_dtype)
        w_cat = w_cat.astype(compute_dtype)

    tm = _pick_tm(M)
    n_blocks = pl.cdiv(M, tm)
    M_pad = n_blocks * tm
    if M_pad != M:
        # Row-independent op: zero-pad ragged M rather than collapsing to one
        # giant (un-pipelined, VMEM-busting) block.
        x2 = jnp.pad(x2, ((0, M_pad - M), (0, 0)))

    grid_spec = pltpu.PrefetchScalarGridSpec(
        num_scalar_prefetch=0,
        grid=(n_blocks,),
        in_specs=[
            pl.BlockSpec((tm, d_model), lambda i: (i, 0)),    # x tile
            pl.BlockSpec((d_model, d_ff), lambda i: (0, 0)),  # resident weight
        ],
        out_specs=pl.BlockSpec((tm, d_half), lambda i: (i, 0)),
    )

    out = pl.pallas_call(
        _smffn_kernel,
        out_shape=jax.ShapeDtypeStruct((M_pad, d_half), out_dtype),
        grid_spec=grid_spec,
        compiler_params=pltpu.CompilerParams(
            dimension_semantics=("parallel",)),
    )(x2, w_cat)

    if M_pad != M:
        out = out[:M]
    return out.reshape(*lead, d_half)


def smffn_branch_ref(x, w3):
    """Pure-JAX reference mirroring SMFFNBranch.forward (exact f32 matmul)."""
    y = jnp.matmul(x, w3.T, precision=jax.lax.Precision.HIGHEST)
    a, g = jnp.split(y, 2, axis=-1)
    return a * jax.nn.sigmoid(g)


if __name__ == "__main__":
    # Small shapes consistent with the module: tokens (2, 8, 16), d_model=64,
    # d_ff=256 (so each chunk half = 128 -> lane-dense output).
    B, D, N = 2, 8, 16
    d_model, d_ff = 64, 256

    key = jax.random.PRNGKey(0)
    kx, kw = jax.random.split(key, 2)

    x = jax.random.normal(kx, (B, D, N, d_model), dtype=jnp.float32)
    w3 = 0.1 * jax.random.normal(kw, (d_ff, d_model), dtype=jnp.float32)

    w_cat = prepare_weight(w3)  # hoisted: done once where the weight lives
    out_ref = smffn_branch_ref(x, w3)

    # f32 operands.
    out = smffn_branch(x, w_cat)
    out = jax.block_until_ready(out)
    assert out.shape == (B, D, N, d_ff // 2)
    assert jnp.allclose(out, out_ref, rtol=2e-2, atol=2e-2)

    # bf16 operands (perf-review option): halves HBM traffic; f32 accumulate.
    out_bf16 = smffn_branch(x, w_cat, compute_dtype=jnp.bfloat16)
    out_bf16 = jax.block_until_ready(out_bf16)
    assert out_bf16.shape == (B, D, N, d_ff // 2)
    assert jnp.allclose(out_bf16, out_ref, rtol=5e-2, atol=5e-2)

    print("KERNEL_OK")
</pallas_src>

<mosaic_0001>
module attributes {stable_mosaic.version = 11 : i64} {
  func.func @_smffn_kernel(%arg0: i32, %arg1: memref<128x64xf32, #tpu.memory_space<vmem>>, %arg2: memref<64x256xf32, #tpu.memory_space<vmem>>, %arg3: memref<128x128xf32, #tpu.memory_space<vmem>>) attributes {dimension_semantics = [#tpu.dimension_semantics<parallel>], iteration_bounds = array<i64: 2>, scalar_prefetch = 0 : i64, scratch_operands = 0 : i64, tpu.core_type = #tpu.core_type<tc>, window_params = [{transform_indices = @transform_0, window_bounds = array<i64: 128, 64>}, {pipeline_mode = #tpu.pipeline_mode<synchronous>, transform_indices = @transform_1, window_bounds = array<i64: 64, 256>}, {transform_indices = @transform_2, window_bounds = array<i64: 128, 128>}]} {
    %c0 = arith.constant 0 : index
    %c0_0 = arith.constant 0 : index
    %0 = vector.load %arg1[%c0, %c0_0] : memref<128x64xf32, #tpu.memory_space<vmem>>, vector<128x64xf32>
    %c0_1 = arith.constant 0 : index
    %c0_2 = arith.constant 0 : index
    %1 = vector.load %arg2[%c0_1, %c0_2] : memref<64x256xf32, #tpu.memory_space<vmem>>, vector<64x256xf32>
    %cst = arith.constant dense<0.000000e+00> : vector<128x256xf32>
    %2 = tpu.matmul %0, %1, %cst {dimension_numbers = #tpu.dot_dimension_numbers<[1], [0], [0], [1], [0, 0, 1, 1], [], []>} : vector<128x64xf32>, vector<64x256xf32>, vector<128x256xf32> -> vector<128x256xf32>
    %3 = vector.extract_strided_slice %2 {offsets = [0, 0], sizes = [128, 128], strides = [1, 1]} : vector<128x256xf32> to vector<128x128xf32>
    %4 = vector.extract_strided_slice %2 {offsets = [0, 128], sizes = [128, 128], strides = [1, 1]} : vector<128x256xf32> to vector<128x128xf32>
    %cst_3 = arith.constant 5.000000e-01 : f32
    %5 = vector.broadcast %cst_3 : f32 to vector<128x128xf32>
    %6 = arith.mulf %5, %4 : vector<128x128xf32>
    %7 = math.tanh %6 : vector<128x128xf32>
    %cst_4 = arith.constant 1.000000e+00 : f32
    %8 = vector.broadcast %cst_4 : f32 to vector<128x128xf32>
    %9 = arith.addf %7, %8 : vector<128x128xf32>
    %cst_5 = arith.constant 5.000000e-01 : f32
    %10 = vector.broadcast %cst_5 : f32 to vector<128x128xf32>
    %11 = arith.mulf %10, %9 : vector<128x128xf32>
    %12 = arith.mulf %3, %11 : vector<128x128xf32>
    %c0_6 = arith.constant 0 : index
    %c0_7 = arith.constant 0 : index
    %13 = vector.load %arg3[%c0_6, %c0_7] : memref<128x128xf32, #tpu.memory_space<vmem>>, vector<128x128xf32>
    tpu.vector_store %arg3[%c0_6, %c0_7], %12 {strides = array<i32>} : memref<128x128xf32, #tpu.memory_space<vmem>>, vector<128x128xf32>,
    return
  }
  func.func @transform_0(%arg0: i32) -> (i32, i32) {
    %c0_i32 = arith.constant 0 : i32
    %c0_i32_0 = arith.constant 0 : i32
    return %arg0, %c0_i32 : i32, i32
  }
  func.func @transform_1(%arg0: i32) -> (i32, i32) {
    %c0_i32 = arith.constant 0 : i32
    %c0_i32_0 = arith.constant 0 : i32
    %c0_i32_1 = arith.constant 0 : i32
    return %c0_i32, %c0_i32_0 : i32, i32
  }
  func.func @transform_2(%arg0: i32) -> (i32, i32) {
    %c0_i32 = arith.constant 0 : i32
    %c0_i32_0 = arith.constant 0 : i32
    return %arg0, %c0_i32 : i32, i32
  }
}

</mosaic_0001>

<llo_original>
// kernel: tpu_custom_call.1
$region0: #{tpu_custom_call.1}
  #allocation0 [shape = 'u32[]', space=smem, size = 0x4, offset = 0x4, fixed_abs, tag = 'smem constant byte address 0x4 - core index']
  #allocation1 [shape = 'u32[144,128]{1,0:T(1,128)}', space=vmem, size = 0x12000, scoped, tag = 'internal scratch']
  %s0 = inlined_call_operand.vmem [shape: f32[256,64], index: 0, kind: input, shape index: {}]
  %s1 = inlined_call_operand.vmem [shape: f32[64,256], index: 1, kind: input, shape index: {}]
  %s2 = inlined_call_operand.hbm [shape: f32[256,128], index: 2, kind: output, shape index: {}]
  %s3 = sld [smem:[#allocation0]]
  $region41: #{tpu_custom_call.1} parent=0
    _
  %s5 = ssub.s32 1, %s3
  %s6 = scalar_select 0, %s5, %s3
  $region1: #{tpu_custom_call.1} parent=0
    #allocation2 [shape = 'u8[131072]{0}', space=vmem, size = 0x20000, scoped, tag = 'output window, operand 0']
    #allocation3 [shape = 's32[2]{0}', space=sflag, size = 0x8, scoped, tag = 'scoped memory for tpu_custom_call.1']
    %7 = vsyncpa [#allocation3], 0
    %s8 = scalar_lea.sflag [#allocation3], 1
    %9 = vsyncpa %s8, 0
    loop: start=0, step=1, limit=4
    $region2: #{tpu_custom_call.1} parent=1 // loop_pre_header
      _
    $region3: #{tpu_custom_call.1} parent=1 // loop_header
      %s11 = sphi 0, %s15
      %p12 = scmp.ge.s32.totalorder %s11, 4
      %s21 = sphi 0, %s23
      %s24 = sphi 0, %s21
      %s25 = sphi 0, %s24
      %s41 = sphi 0, %s25
      %s45 = sphi 0, %s45
      %s47 = sphi 0, %s45
      %s48 = sphi 0, %s47
      %s62 = sphi 0, %s48
      %s68 = sphi 0, %s70
      %s71 = sphi 0, %s68
      %s72 = sphi 0, %s71
      %s88 = sphi 0, %s72
    $region4: #{tpu_custom_call.1} parent=1 // loop_header_branch
      %14 = sbr.rel (%p12) target = $region8
    $region5: #{tpu_custom_call.1} parent=1 // loop_body
      %s16 = ssub.s32 %s11, 1
      %s17 = ssub.s32 %s11, 2
      %s18 = sadd.s32 %s11, 1
      %s19 = ssub.s32 %s11, %s18
      %p20 = scmp.eq.s32.totalorder %s19, 0
      %s22 = sadd.s32 %s21, 1
      %s23 = scalar_select %p20, %s21, %s22
      %p26 = pneg %p20
      %p27 = scmp.eq.s32.totalorder %s11, 1
      %p28 = por %p26, %p27
      %p29 = scmp.ne.s32.totalorder %s21, %s24
      %p30 = scmp.eq.s32.totalorder %s11, 0
      %p31 = por %p29, %p30
      %p32 = scmp.ne.s32.totalorder %s21, %s24
      %p33 = scmp.eq.s32.totalorder %s16, 1
      %p34 = por %p32, %p33
      %p35 = scmp.ne.s32.totalorder %s24, %s25
      %p36 = scmp.eq.s32.totalorder %s16, 0
      %p37 = por %p35, %p36
      %p38 = scmp.ne.s32.totalorder %s24, %s25
      %p39 = scmp.eq.s32.totalorder %s17, 1
      %p40 = por %p38, %p39
      %p42 = scmp.ne.s32.totalorder %s25, %s41
      %p43 = scmp.eq.s32.totalorder %s17, 0
      %p44 = por %p42, %p43
      %s46 = sadd.s32 %s45, 1
      %p49 = scmp.eq.s32.totalorder %s11, 1
      %p50 = scmp.ne.s32.totalorder %s45, %s47
      %p51 = scmp.eq.s32.totalorder %s11, 0
      %p52 = por %p50, %p51
      %p53 = scmp.ne.s32.totalorder %s45, %s47
      %p54 = scmp.eq.s32.totalorder %s16, 1
      %p55 = por %p53, %p54
      %p56 = scmp.ne.s32.totalorder %s47, %s48
      %p57 = scmp.eq.s32.totalorder %s16, 0
      %p58 = por %p56, %p57
      %p59 = scmp.ne.s32.totalorder %s47, %s48
      %p60 = scmp.eq.s32.totalorder %s17, 1
      %p61 = por %p59, %p60
      %p63 = scmp.ne.s32.totalorder %s48, %s62
      %p64 = scmp.eq.s32.totalorder %s17, 0
      %p65 = por %p63, %p64
      %s66 = ssub.s32 %s11, %s18
      %p67 = scmp.eq.s32.totalorder %s66, 0
      %s69 = sadd.s32 %s68, 1
      %s70 = scalar_select %p67, %s68, %s69
      %p73 = pneg %p67
      %p74 = scmp.eq.s32.totalorder %s11, 1
      %p75 = por %p73, %p74
      %p76 = scmp.ne.s32.totalorder %s68, %s71
      %p77 = scmp.eq.s32.totalorder %s11, 0
      %p78 = por %p76, %p77
      %p79 = scmp.ne.s32.totalorder %s68, %s71
      %p80 = scmp.eq.s32.totalorder %s16, 1
      %p81 = por %p79, %p80
      %p82 = scmp.ne.s32.totalorder %s71, %s72
      %p83 = scmp.eq.s32.totalorder %s16, 0
      %p84 = por %p82, %p83
      %p85 = scmp.ne.s32.totalorder %s71, %s72
      %p86 = scmp.eq.s32.totalorder %s17, 1
      %p87 = por %p85, %p86
      %p89 = scmp.ne.s32.totalorder %s72, %s88
      %p90 = scmp.eq.s32.totalorder %s17, 0
      %p91 = por %p89, %p90
      %p92 = scmp.le.s32.totalorder 1, %s11
      %p93 = scmp.lt.s32.totalorder %s11, 3
      %p94 = pnand %p92, %p93
      %p95 = pneg %p94
      // Predicated region
      $region9: #{tpu_custom_call.1} parent=5 // pred_check
        _
      $region10: #{tpu_custom_call.1} parent=5 // pred_check_branch
        %97 = sbr.rel (%p94) target = $region12
      $region11: #{tpu_custom_call.1} parent=5 // pred_region
        %s98 = ssub.s32 %s11, 1
        // Predicated region
        $region13: #{tpu_custom_call.1} parent=11 // pred_check
          %p99 = pneg %p58
        $region14: #{tpu_custom_call.1} parent=11 // pred_check_branch
          %101 = sbr.rel (%p99) target = $region16
        $region15: #{tpu_custom_call.1} parent=11 // pred_region
          _
        $region16: #{tpu_custom_call.1} parent=11 // pred_fallthru
          _
      $region12: #{tpu_custom_call.1} parent=5 // pred_fallthru
        _
      %p102 = scmp.lt.s32.totalorder %s11, 2
      // Predicated region
      $region17: #{tpu_custom_call.1} parent=5 // pred_check
        %p103 = pneg %p102
      $region18: #{tpu_custom_call.1} parent=5 // pred_check_branch
        %105 = sbr.rel (%p103) target = $region20
      $region19: #{tpu_custom_call.1} parent=5 // pred_region
        // Predicated region
        $region21: #{tpu_custom_call.1} parent=19 // pred_check
          %p106 = pneg %p31
        $region22: #{tpu_custom_call.1} parent=19 // pred_check_branch
          %108 = sbr.rel (%p106) target = $region24
        $region23: #{tpu_custom_call.1} parent=19 // pred_region
          %s109 = smul.u32 16, %s11
          %p110 = scmp.lt.s32.totalorder %s109, 31
          %s111 = scalar_select %p110, %s109, 31
          %s112 = smul.addr %s111, 8
          %s113 = scalar_lea.vmem %s0, %s112
          %s114 = smul.u32 16, %s11
        $region24: #{tpu_custom_call.1} parent=19 // pred_fallthru
          _
      $region20: #{tpu_custom_call.1} parent=5 // pred_fallthru
        _
      %p115 = scmp.le.s32.totalorder 1, %s11
      %p116 = scmp.lt.s32.totalorder %s11, 3
      %p117 = pnand %p115, %p116
      %p118 = pneg %p117
      // Predicated region
      $region25: #{tpu_custom_call.1} parent=5 // pred_check
        _
      $region26: #{tpu_custom_call.1} parent=5 // pred_check_branch
        %120 = sbr.rel (%p117) target = $region28
      $region27: #{tpu_custom_call.1} parent=5 // pred_region
        %s121 = ssub.s32 %s11, 1
        %s122 = smul.u32 16, %s16
        %p123 = scmp.lt.s32.totalorder %s122, 31
        %s124 = scalar_select %p123, %s122, 31
        %s125 = smul.addr %s124, 8
        %s126 = scalar_lea.vmem %s0, %s125
        %p127 = pneg %p37
        %p128 = pneg %p34
        %p129 = pneg %p58
        %p130 = pneg %p55
        %p131 = pneg %p84
        %p132 = pneg %p81
        %s133 = sand.u32 %s71, 1
        %s134 = scalar_lea.sflag [#allocation3], %s133
        %s135 = sand.u32 %s71, 1
        %s136 = smul.addr %s135, 128
        %s137 = scalar_lea.vmem [#allocation2], %s136
        %s138 = smul.u32 16, %s16
        %p139 = scmp.lt.s32.totalorder %s138, 31
        %s140 = scalar_select %p139, %s138, 31
        %s141 = smul.addr %s140, 8
        %s142 = scalar_lea.vmem %s0, %s141
        %s143 = smul.u32 16, %s16
        %s144 = smul.u32 16, %s16
        %v145 = vld [vmem:[%s142] sm:$0xff]
        %v146 = vld [vmem:[%s142 + $0x8] sm:$0xff]
        %v147 = vld [vmem:[%s142 + $0x10] sm:$0xff]
        %v148 = vld [vmem:[%s142 + $0x18] sm:$0xff]
        %v149 = vld [vmem:[%s142 + $0x20] sm:$0xff]
        %v150 = vld [vmem:[%s142 + $0x28] sm:$0xff]
        %v151 = vld [vmem:[%s142 + $0x30] sm:$0xff]
        %v152 = vld [vmem:[%s142 + $0x38] sm:$0xff]
        %v153 = vld [vmem:[%s142 + $0x40] sm:$0xff]
        %v154 = vld [vmem:[%s142 + $0x48] sm:$0xff]
        %v155 = vld [vmem:[%s142 + $0x50] sm:$0xff]
        %v156 = vld [vmem:[%s142 + $0x58] sm:$0xff]
        %v157 = vld [vmem:[%s142 + $0x60] sm:$0xff]
        %v158 = vld [vmem:[%s142 + $0x68] sm:$0xff]
        %v159 = vld [vmem:[%s142 + $0x70] sm:$0xff]
        %v160 = vld [vmem:[%s142 + $0x78] sm:$0xff]
        %v161 = vld [vmem:[%s1] sm:$0xff]
        %v162 = vld [vmem:[%s1 + $0x8] sm:$0xff]
        %v163 = vld [vmem:[%s1 + $0x10] sm:$0xff]
        %v164 = vld [vmem:[%s1 + $0x18] sm:$0xff]
        %v165 = vld [vmem:[%s1 + $0x20] sm:$0xff]
        %v166 = vld [vmem:[%s1 + $0x28] sm:$0xff]
        %v167 = vld [vmem:[%s1 + $0x30] sm:$0xff]
        %v168 = vld [vmem:[%s1 + $0x38] sm:$0xff]
        %v169 = vld [vmem:[%s1 + $0x40] sm:$0xff]
        %v170 = vld [vmem:[%s1 + $0x48] sm:$0xff]
        %v171 = vld [vmem:[%s1 + $0x50] sm:$0xff]
        %v172 = vld [vmem:[%s1 + $0x58] sm:$0xff]
        %v173 = vld [vmem:[%s1 + $0x60] sm:$0xff]
        %v174 = vld [vmem:[%s1 + $0x68] sm:$0xff]
        %v175 = vld [vmem:[%s1 + $0x70] sm:$0xff]
        %v176 = vld [vmem:[%s1 + $0x78] sm:$0xff]
        %vm177 = vcmask 523264
        %v179 = vsel %vm177, %v145, 0
        %v182 = vsel %vm177, %v146, 0
        %v185 = vsel %vm177, %v147, 0
        %v188 = vsel %vm177, %v148, 0
        %v191 = vsel %vm177, %v149, 0
        %v194 = vsel %vm177, %v150, 0
        %v197 = vsel %vm177, %v151, 0
        %v200 = vsel %vm177, %v152, 0
        %v203 = vsel %vm177, %v153, 0
        %v206 = vsel %vm177, %v154, 0
        %v209 = vsel %vm177, %v155, 0
        %v212 = vsel %vm177, %v156, 0
        %v215 = vsel %vm177, %v157, 0
        %v218 = vsel %vm177, %v158, 0
        %v221 = vsel %vm177, %v159, 0
        %v224 = vsel %vm177, %v160, 0
        %226 = vmatprep.subr.mxu0 %v162
        %227 = vmatpush1.msra.mxu0 %v161
        %228 = vmatprep.subr.mxu0 %v164
        %229 = vmatpush1.msra.mxu0 %v163
        %230 = vmatprep.subr.mxu0 %v166
        %231 = vmatpush1.msra.mxu0 %v165
        %232 = vmatprep.subr.mxu0 %v168
        %233 = vmatpush1.msra.mxu0 %v167
        %234 = vmatprep.subr.mxu0 %v170
        %235 = vmatpush1.msra.mxu0 %v169
        %236 = vmatprep.subr.mxu0 %v172
        %237 = vmatpush1.msra.mxu0 %v171
        %238 = vmatprep.subr.mxu0 %v174
        %239 = vmatpush1.msra.mxu0 %v173
        %240 = vmatprep.subr.mxu0 %v176
        %241 = vmatpush1.msra.mxu0 %v175
        %242 = vmatprep.subr.mxu0 0.0
        %243 = vmatpush1.msra.mxu0 0.0
        %244 = vmatprep.subr.mxu0 0.0
        %245 = vmatpush1.msra.mxu0 0.0
        %246 = vmatprep.subr.mxu0 0.0
        %247 = vmatpush1.msra.mxu0 0.0
        %248 = vmatprep.subr.mxu0 0.0
        %249 = vmatpush1.msra.mxu0 0.0
        %250 = vmatprep.subr.mxu0 0.0
        %251 = vmatpush1.msra.mxu0 0.0
        %252 = vmatprep.subr.mxu0 0.0
        %253 = vmatpush1.msra.mxu0 0.0
        %254 = vmatprep.subr.mxu0 0.0
        %255 = vmatpush1.msra.mxu0 0.0
        %256 = vmatprep.subr.mxu0 0.0
        %257 = vmatpush1.msra.mxu0 0.0
        %258 = vmatprep.subr.mxu0 0.0
        %259 = vmatpush1.msra.mxu0 0.0
        %260 = vmatprep.subr.mxu0 0.0
        %261 = vmatpush1.msra.mxu0 0.0
        %262 = vmatprep.subr.mxu0 0.0
        %263 = vmatpush1.msra.mxu0 0.0
        %264 = vmatprep.subr.mxu0 0.0
        %265 = vmatpush1.msra.mxu0 0.0
        %266 = vmatprep.subr.mxu0 0.0
        %267 = vmatpush1.msra.mxu0 0.0
        %268 = vmatprep.subr.mxu0 0.0
        %269 = vmatpush1.msra.mxu0 0.0
        %270 = vmatprep.subr.mxu0 0.0
        %271 = vmatpush1.msra.mxu0 0.0
        %272 = vmatprep.subr.mxu0 0.0
        %273 = vmatpush1.msra.mxu0 0.0
        %274 = vmatprep.subr.mxu0 0.0
        %275 = vmatpush1.msra.mxu0 0.0
        %276 = vmatprep.subr.mxu0 0.0
        %277 = vmatpush1.msra.mxu0 0.0
        %278 = vmatprep.subr.mxu0 0.0
        %279 = vmatpush1.msra.mxu0 0.0
        %280 = vmatprep.subr.mxu0 0.0
        %281 = vmatpush1.msra.mxu0 0.0
        %282 = vmatprep.subr.mxu0 0.0
        %283 = vmatpush1.msra.mxu0 0.0
        %284 = vmatprep.subr.mxu0 0.0
        %285 = vmatpush1.msra.mxu0 0.0
        %286 = vmatprep.subr.mxu0 0.0
        %287 = vmatpush1.msra.mxu0 0.0
        %288 = vmatprep.subr.mxu0 0.0
        %289 = vmatpush1.msra.mxu0 0.0
        %290 = vmatprep.mubr.f32.mxu0 0.0
        %291 = vmatmul.mubr.f32.gmra.mrb[0].mxu0 %v179
        %v292 = vpop.f32.mrb[0].mxu0
        %v293 = vadd.f32 0.0, %v292
        %v294 = vpop.f32.mrb[0].mxu0
        %v295 = vadd.f32 0.0, %v294
        %296 = vmatprep.mubr.f32.mxu0 0.0
        %297 = vmatmul.mubr.f32.gmra.mrb[0].mxu0 %v182
        %v298 = vpop.f32.mrb[0].mxu0
        %v299 = vadd.f32 0.0, %v298
        %v300 = vpop.f32.mrb[0].mxu0
        %v301 = vadd.f32 0.0, %v300
        %302 = vmatprep.mubr.f32.mxu0 0.0
        %303 = vmatmul.mubr.f32.gmra.mrb[0].mxu0 %v185
        %v304 = vpop.f32.mrb[0].mxu0
        %v305 = vadd.f32 0.0, %v304
        %v306 = vpop.f32.mrb[0].mxu0
        %v307 = vadd.f32 0.0, %v306
        %308 = vmatprep.mubr.f32.mxu0 0.0
        %309 = vmatmul.mubr.f32.gmra.mrb[0].mxu0 %v188
        %v310 = vpop.f32.mrb[0].mxu0
        %v311 = vadd.f32 0.0, %v310
        %v312 = vpop.f32.mrb[0].mxu0
        %v313 = vadd.f32 0.0, %v312
        %314 = vmatprep.mubr.f32.mxu0 0.0
        %315 = vmatmul.mubr.f32.gmra.mrb[0].mxu0 %v191
        %v316 = vpop.f32.mrb[0].mxu0
        %v317 = vadd.f32 0.0, %v316
        %v318 = vpop.f32.mrb[0].mxu0
        %v319 = vadd.f32 0.0, %v318
        %320 = vmatprep.mubr.f32.mxu0 0.0
        %321 = vmatmul.mubr.f32.gmra.mrb[0].mxu0 %v194
        %v322 = vpop.f32.mrb[0].mxu0
        %v323 = vadd.f32 0.0, %v322
        %v324 = vpop.f32.mrb[0].mxu0
        %v325 = vadd.f32 0.0, %v324
        %326 = vmatprep.mubr.f32.mxu0 0.0
        %327 = vmatmul.mubr.f32.gmra.mrb[0].mxu0 %v197
        %v328 = vpop.f32.mrb[0].mxu0
        %v329 = vadd.f32 0.0, %v328
        %v330 = vpop.f32.mrb[0].mxu0
        %v331 = vadd.f32 0.0, %v330
        %332 = vmatprep.mubr.f32.mxu0 0.0
        %333 = vmatmul.mubr.f32.gmra.mrb[0].mxu0 %v200
        %v334 = vpop.f32.mrb[0].mxu0
        %v335 = vadd.f32 0.0, %v334
        %v336 = vpop.f32.mrb[0].mxu0
        %v337 = vadd.f32 0.0, %v336
        %338 = vmatprep.mubr.f32.mxu0 0.0
        %339 = vmatmul.mubr.f32.gmra.mrb[0].mxu0 %v203
        %v340 = vpop.f32.mrb[0].mxu0
        %v341 = vadd.f32 0.0, %v340
        %v342 = vpop.f32.mrb[0].mxu0
        %v343 = vadd.f32 0.0, %v342
        %344 = vmatprep.mubr.f32.mxu0 0.0
        %345 = vmatmul.mubr.f32.gmra.mrb[0].mxu0 %v206
        %v346 = vpop.f32.mrb[0].mxu0
        %v347 = vadd.f32 0.0, %v346
        %v348 = vpop.f32.mrb[0].mxu0
        %v349 = vadd.f32 0.0, %v348
        %350 = vmatprep.mubr.f32.mxu0 0.0
        %351 = vmatmul.mubr.f32.gmra.mrb[0].mxu0 %v209
        %v352 = vpop.f32.mrb[0].mxu0
        %v353 = vadd.f32 0.0, %v352
        %v354 = vpop.f32.mrb[0].mxu0
        %v355 = vadd.f32 0.0, %v354
        %356 = vmatprep.mubr.f32.mxu0 0.0
        %357 = vmatmul.mubr.f32.gmra.mrb[0].mxu0 %v212
        %v358 = vpop.f32.mrb[0].mxu0
        %v359 = vadd.f32 0.0, %v358
        %v360 = vpop.f32.mrb[0].mxu0
        %v361 = vadd.f32 0.0, %v360
        %362 = vmatprep.mubr.f32.mxu0 0.0
        %363 = vmatmul.mubr.f32.gmra.mrb[0].mxu0 %v215
        %v364 = vpop.f32.mrb[0].mxu0
        %v365 = vadd.f32 0.0, %v364
        %v366 = vpop.f32.mrb[0].mxu0
        %v367 = vadd.f32 0.0, %v366
        %368 = vmatprep.mubr.f32.mxu0 0.0
        %369 = vmatmul.mubr.f32.gmra.mrb[0].mxu0 %v218
        %v370 = vpop.f32.mrb[0].mxu0
        %v371 = vadd.f32 0.0, %v370
        %v372 = vpop.f32.mrb[0].mxu0
        %v373 = vadd.f32 0.0, %v372
        %374 = vmatprep.mubr.f32.mxu0 0.0
        %375 = vmatmul.mubr.f32.gmra.mrb[0].mxu0 %v221
        %v376 = vpop.f32.mrb[0].mxu0
        %v377 = vadd.f32 0.0, %v376
        %v378 = vpop.f32.mrb[0].mxu0
        %v379 = vadd.f32 0.0, %v378
        %380 = vmatprep.mubr.f32.mxu0 0.0
        %381 = vmatmul.mubr.f32.gmra.mrb[0].mxu0 %v224
        %v382 = vpop.f32.mrb[0].mxu0
        %v383 = vadd.f32 0.0, %v382
        %v384 = vpop.f32.mrb[0].mxu0
        %v385 = vadd.f32 0.0, %v384
        %386 = vdwg.mxu0
        %v387 = vmul.f32 %v295, 0.5
        %v388 = vmul.f32 %v301, 0.5
        %v389 = vmul.f32 %v307, 0.5
        %v390 = vmul.f32 %v313, 0.5
        %v391 = vmul.f32 %v319, 0.5
        %v392 = vmul.f32 %v325, 0.5
        %v393 = vmul.f32 %v331, 0.5
        %v394 = vmul.f32 %v337, 0.5
        %v395 = vmul.f32 %v343, 0.5
        %v396 = vmul.f32 %v349, 0.5
        %v397 = vmul.f32 %v355, 0.5
        %v398 = vmul.f32 %v361, 0.5
        %v399 = vmul.f32 %v367, 0.5
        %v400 = vmul.f32 %v373, 0.5
        %v401 = vmul.f32 %v379, 0.5
        %v402 = vmul.f32 %v385, 0.5
        %v403 = vtanh.pop %v387
        %v404 = vtanh.pop %v388
        %v405 = vtanh.pop %v389
        %v406 = vtanh.pop %v390
        %v407 = vtanh.pop %v391
        %v408 = vtanh.pop %v392
        %v409 = vtanh.pop %v393
        %v410 = vtanh.pop %v394
        %v411 = vtanh.pop %v395
        %v412 = vtanh.pop %v396
        %v413 = vtanh.pop %v397
        %v414 = vtanh.pop %v398
        %v415 = vtanh.pop %v399
        %v416 = vtanh.pop %v400
        %v417 = vtanh.pop %v401
        %v418 = vtanh.pop %v402
        %v419 = vadd.f32 %v403, 1.0
        %v420 = vadd.f32 %v404, 1.0
        %v421 = vadd.f32 %v405, 1.0
        %v422 = vadd.f32 %v406, 1.0
        %v423 = vadd.f32 %v407, 1.0
        %v424 = vadd.f32 %v408, 1.0
        %v425 = vadd.f32 %v409, 1.0
        %v426 = vadd.f32 %v410, 1.0
        %v427 = vadd.f32 %v411, 1.0
        %v428 = vadd.f32 %v412, 1.0
        %v429 = vadd.f32 %v413, 1.0
        %v430 = vadd.f32 %v414, 1.0
        %v431 = vadd.f32 %v415, 1.0
        %v432 = vadd.f32 %v416, 1.0
        %v433 = vadd.f32 %v417, 1.0
        %v434 = vadd.f32 %v418, 1.0
        %v435 = vmul.f32 %v419, 0.5
        %v436 = vmul.f32 %v420, 0.5
        %v437 = vmul.f32 %v421, 0.5
        %v438 = vmul.f32 %v422, 0.5
        %v439 = vmul.f32 %v423, 0.5
        %v440 = vmul.f32 %v424, 0.5
        %v441 = vmul.f32 %v425, 0.5
        %v442 = vmul.f32 %v426, 0.5
        %v443 = vmul.f32 %v427, 0.5
        %v444 = vmul.f32 %v428, 0.5
        %v445 = vmul.f32 %v429, 0.5
        %v446 = vmul.f32 %v430, 0.5
        %v447 = vmul.f32 %v431, 0.5
        %v448 = vmul.f32 %v432, 0.5
        %v449 = vmul.f32 %v433, 0.5
        %v450 = vmul.f32 %v434, 0.5
        %v451 = vmul.f32 %v293, %v435
        %v452 = vmul.f32 %v299, %v436
        %v453 = vmul.f32 %v305, %v437
        %v454 = vmul.f32 %v311, %v438
        %v455 = vmul.f32 %v317, %v439
        %v456 = vmul.f32 %v323, %v440
        %v457 = vmul.f32 %v329, %v441
        %v458 = vmul.f32 %v335, %v442
        %v459 = vmul.f32 %v341, %v443
        %v460 = vmul.f32 %v347, %v444
        %v461 = vmul.f32 %v353, %v445
        %v462 = vmul.f32 %v359, %v446
        %v463 = vmul.f32 %v365, %v447
        %v464 = vmul.f32 %v371, %v448
        %v465 = vmul.f32 %v377, %v449
        %v466 = vmul.f32 %v383, %v450
        %467 = vst [vmem:[%s137] sm:$0xff] %v451
        %468 = vst [vmem:[%s137 + $0x8] sm:$0xff] %v452
        %469 = vst [vmem:[%s137 + $0x10] sm:$0xff] %v453
        %470 = vst [vmem:[%s137 + $0x18] sm:$0xff] %v454
        %471 = vst [vmem:[%s137 + $0x20] sm:$0xff] %v455
        %472 = vst [vmem:[%s137 + $0x28] sm:$0xff] %v456
        %473 = vst [vmem:[%s137 + $0x30] sm:$0xff] %v457
        %474 = vst [vmem:[%s137 + $0x38] sm:$0xff] %v458
        %475 = vst [vmem:[%s137 + $0x40] sm:$0xff] %v459
        %476 = vst [vmem:[%s137 + $0x48] sm:$0xff] %v460
        %477 = vst [vmem:[%s137 + $0x50] sm:$0xff] %v461
        %478 = vst [vmem:[%s137 + $0x58] sm:$0xff] %v462
        %479 = vst [vmem:[%s137 + $0x60] sm:$0xff] %v463
        %480 = vst [vmem:[%s137 + $0x68] sm:$0xff] %v464
        %481 = vst [vmem:[%s137 + $0x70] sm:$0xff] %v465
        %482 = vst [vmem:[%s137 + $0x78] sm:$0xff] %v466
        %s483 = sand.u32 %s71, 1
        %s484 = scalar_lea.sflag [#allocation3], %s483
        %s485 = sand.u32 %s71, 1
        %s486 = smul.addr %s485, 128
        %s487 = scalar_lea.vmem [#allocation2], %s486
        // Predicated region
        $region29: #{tpu_custom_call.1} parent=27 // pred_check
          %p488 = pneg %p81
        $region30: #{tpu_custom_call.1} parent=27 // pred_check_branch
          %490 = sbr.rel (%p488) target = $region32
        $region31: #{tpu_custom_call.1} parent=27 // pred_region
          %s491 = smul.u32 16, %s16
          %s493 = ssub.s32 2048, 2048
          %494 = vsyncadd %s484, %s493
          %s495 = smul.addr %s491, 128
          %s496 = scalar_lea.hbm %s2, %s495
          %s497 = sshll.u32 %s487, 4
          %s498 = int_to_ptr.vmem [resolvable:$true] %s497
          %503 = dma.vmem_to_hbm [thread:$0]  %s498, 2048, %s496, %s484, 128, 128, 8
        $region32: #{tpu_custom_call.1} parent=27 // pred_fallthru
          _
      $region28: #{tpu_custom_call.1} parent=5 // pred_fallthru
        _
      %p504 = scmp.le.s32.totalorder 2, %s11
      // Predicated region
      $region33: #{tpu_custom_call.1} parent=5 // pred_check
        %p505 = pneg %p504
      $region34: #{tpu_custom_call.1} parent=5 // pred_check_branch
        %507 = sbr.rel (%p505) target = $region36
      $region35: #{tpu_custom_call.1} parent=5 // pred_region
        %s508 = ssub.s32 %s11, 2
        // Predicated region
        $region37: #{tpu_custom_call.1} parent=35 // pred_check
          %p509 = pneg %p87
        $region38: #{tpu_custom_call.1} parent=35 // pred_check_branch
          %511 = sbr.rel (%p509) target = $region40
        $region39: #{tpu_custom_call.1} parent=35 // pred_region
          %s512 = sand.u32 %s72, 1
          %s513 = scalar_lea.sflag [#allocation3], %s512
          %s514 = sand.u32 %s72, 1
          %s515 = smul.addr %s514, 128
          %s516 = scalar_lea.vmem [#allocation2], %s515
          %517 = dma.done %s513, 2048
        $region40: #{tpu_custom_call.1} parent=35 // pred_fallthru
          _
      $region36: #{tpu_custom_call.1} parent=5 // pred_fallthru
        _
    $region6: #{tpu_custom_call.1} parent=1 // loop_footer
      %s15 = sadd.s32 1, %s11
    $region7: #{tpu_custom_call.1} parent=1 // loop_footer_branch
      %10 = sbr.rel target = $region3
    $region8: #{tpu_custom_call.1} parent=1 // loop_exit
      _
    %518 = vsyncpa [#allocation3], 1
    %s519 = scalar_lea.sflag [#allocation3], 1
    %520 = vsyncpa %s519, 1

</llo_original>
